<compile_context>
chip_gen: v6e
topology: v6e:2x2x1
jax: 0.10.0
libtpu: 0.0.40
codegen_flags: <defaults>
</compile_context>

<pallas_src>
import functools

import jax
import jax.numpy as jnp
from jax.experimental import pallas as pl
from jax.experimental.pallas import tpu as pltpu


def _block_kernel(x_ref, w1_ref, b1_ref, w2_ref, b2_ref, o_ref, *, pad):
    # x_ref : (H, W*C)          input rows, channels innermost on the lane axis
    # w1_ref: (KH, W*C, W*HID)  banded conv1 weights (kw taps folded in)
    # b1_ref: (1, W*HID)        conv1 bias tiled over W (f32)
    # w2_ref: (KH, W*HID, W*C)  banded conv2 weights
    # b2_ref: (1, W*C)          conv2 bias tiled over W (f32)
    # o_ref : (H, W*C)
    H, WC = x_ref.shape
    KH = w1_ref.shape[0]
    WHID = w1_ref.shape[2]

    x = x_ref[...]

    # ---- Conv1: pad `pad` zero rows along H, then KH fat banded matmuls ----
    zx = jnp.zeros((pad, WC), x.dtype)
    xp = jnp.concatenate([zx, x, zx], axis=0)                 # (H + 2p, W*C)
    acc1 = jnp.zeros((H, WHID), jnp.float32)
    for kh in range(KH):                                      # KH MXU pushes total
        acc1 = acc1 + jnp.dot(xp[kh:kh + H], w1_ref[kh],
                              preferred_element_type=jnp.float32)
    h = jnp.maximum(acc1 + b1_ref[...], 0.0)                  # (H, W*HID), f32

    # ---- Conv2 (same structure; no VMEM scratch, hidden padded in registers) ----
    hc = h.astype(x.dtype)
    zh = jnp.zeros((pad, WHID), hc.dtype)
    hp = jnp.concatenate([zh, hc, zh], axis=0)                # (H + 2p, W*HID)
    acc2 = jnp.zeros((H, WC), jnp.float32)
    for kh in range(KH):
        acc2 = acc2 + jnp.dot(hp[kh:kh + H], w2_ref[kh],
                              preferred_element_type=jnp.float32)
    y = acc2 + b2_ref[...]

    # ---- residual add + ReLU, lane-dense store ----
    o_ref[...] = jnp.maximum(x.astype(jnp.float32) + y, 0.0).astype(o_ref.dtype)


def _banded_weight(wt, W, pad):
    """Fold the kw taps of a conv into a block-banded matrix.

    wt: (KH, KW, Cin, Cout) cross-correlation taps.
    Returns B: (KH, W*Cin, W*Cout) with
      B[kh, wi*Cin + c, wo*Cout + o] = wt[kh, kw, c, o]   where kw = wi - wo + pad
    and zero outside the band (=> zero padding along W is built in).
    """
    KH, KW, Cin, Cout = wt.shape
    B = jnp.zeros((KH, W * Cin, W * Cout), wt.dtype)
    for kw in range(KW):
        d = kw - pad                                  # wi = wo + d for this tap
        band = jnp.eye(W, k=-d, dtype=wt.dtype)       # band[wi, wo] = (wi == wo + d)
        B = B + jnp.einsum("ab,kco->kacbo", band, wt[:, kw]).reshape(
            KH, W * Cin, W * Cout)
    return B


def block_forward(x_nchw, w1, b1, w2, b2, padding):
    """x_nchw: (N, Cin, H, W); w1: (Hid, Cin, K, K); w2: (Cin, Hid, K, K)."""
    N, C, H, W = x_nchw.shape
    HID, _, KH, KW = w1.shape
    assert w2.shape[0] == C and w2.shape[1] == HID
    # the residual add requires 'same' convs (stride 1, 2*pad == k-1)
    assert KH == KW and 2 * padding == KH - 1

    dtype = x_nchw.dtype
    # NCHW -> (N, H, W*C): channels innermost on the lane axis (single transpose).
    x = jnp.transpose(x_nchw, (0, 2, 3, 1)).reshape(N, H, W * C)

    # torch OIHW -> (KH, KW, In, Out) taps, then fold kw into banded matrices.
    w1t = jnp.transpose(w1, (2, 3, 1, 0)).astype(dtype)       # (KH, KW, C,  HID)
    w2t = jnp.transpose(w2, (2, 3, 1, 0)).astype(dtype)       # (KH, KW, HID, C)
    B1 = _banded_weight(w1t, W, padding)                      # (KH, W*C,   W*HID)
    B2 = _banded_weight(w2t, W, padding)                      # (KH, W*HID, W*C)
    b1r = jnp.tile(b1.astype(jnp.float32), W).reshape(1, W * HID)
    b2r = jnp.tile(b2.astype(jnp.float32), W).reshape(1, W * C)

    flops = 2 * N * KH * H * ((W * C) * (W * HID) + (W * HID) * (W * C))
    bytes_accessed = (2 * x.size * x.dtype.itemsize
                      + (B1.size + B2.size) * B1.dtype.itemsize
                      + (b1r.size + b2r.size) * 4)

    out = pl.pallas_call(
        functools.partial(_block_kernel, pad=padding),
        out_shape=jax.ShapeDtypeStruct((N, H, W * C), dtype),
        grid=(N,),
        in_specs=[
            pl.BlockSpec((None, H, W * C), lambda n: (n, 0, 0)),       # x (per sample)
            pl.BlockSpec((KH, W * C, W * HID), lambda n: (0, 0, 0)),   # B1 (resident)
            pl.BlockSpec((1, W * HID), lambda n: (0, 0)),              # b1
            pl.BlockSpec((KH, W * HID, W * C), lambda n: (0, 0, 0)),   # B2 (resident)
            pl.BlockSpec((1, W * C), lambda n: (0, 0)),                # b2
        ],
        out_specs=pl.BlockSpec((None, H, W * C), lambda n: (n, 0, 0)),
        compiler_params=pltpu.CompilerParams(
            dimension_semantics=("parallel",)),
        cost_estimate=pl.CostEstimate(flops=flops, transcendentals=0,
                                      bytes_accessed=bytes_accessed),
    )(x, B1, b1r, B2, b2r)

    # (N, H, W*C) -> NCHW
    return jnp.transpose(out.reshape(N, H, W, C), (0, 3, 1, 2))


def _ref_forward(x_nchw, w1, b1, w2, b2, padding):
    dn = ("NCHW", "OIHW", "NCHW")
    pads = [(padding, padding), (padding, padding)]
    h = jax.lax.conv_general_dilated(x_nchw, w1, (1, 1), pads, dimension_numbers=dn)
    h = jnp.maximum(h + b1[None, :, None, None], 0.0)
    y = jax.lax.conv_general_dilated(h, w2, (1, 1), pads, dimension_numbers=dn)
    y = y + b2[None, :, None, None]
    return jnp.maximum(x_nchw + y, 0.0)


if __name__ == "__main__":
    # block(in_channel=4, out_channel=4, hid_channel=8, kernel_size=3, padding=1)
    N, C, H, W = 2, 4, 16, 16
    HID, K, PAD = 8, 3, 1

    key = jax.random.PRNGKey(0)
    kx, k1, kb1, k2, kb2 = jax.random.split(key, 5)

    x = jax.random.normal(kx, (N, C, H, W), jnp.float32)
    w1 = jax.random.normal(k1, (HID, C, K, K), jnp.float32) * 0.1
    b1 = jax.random.normal(kb1, (HID,), jnp.float32) * 0.1
    w2 = jax.random.normal(k2, (C, HID, K, K), jnp.float32) * 0.1
    b2 = jax.random.normal(kb2, (C,), jnp.float32) * 0.1

    out = jax.block_until_ready(block_forward(x, w1, b1, w2, b2, PAD))
    ref = jax.block_until_ready(_ref_forward(x, w1, b1, w2, b2, PAD))

    assert out.shape == (N, C, H, W) and out.dtype == jnp.float32
    assert jnp.allclose(out, ref, atol=1e-4, rtol=1e-4), float(jnp.max(jnp.abs(out - ref)))
    print("KERNEL_OK")
</pallas_src>

<mosaic_0001>
module attributes {stable_mosaic.version = 11 : i64} {
  func.func @_block_kernel(%arg0: i32, %arg1: memref<1x16x64xf32, #tpu.memory_space<vmem>>, %arg2: memref<3x64x128xf32, #tpu.memory_space<vmem>>, %arg3: memref<1x128xf32, #tpu.memory_space<vmem>>, %arg4: memref<3x128x64xf32, #tpu.memory_space<vmem>>, %arg5: memref<1x64xf32, #tpu.memory_space<vmem>>, %arg6: memref<1x16x64xf32, #tpu.memory_space<vmem>>) attributes {dimension_semantics = [#tpu.dimension_semantics<parallel>], iteration_bounds = array<i64: 2>, scalar_prefetch = 0 : i64, scratch_operands = 0 : i64, tpu.core_type = #tpu.core_type<tc>, window_params = [{transform_indices = @transform_0, window_bounds = array<i64: 1, 16, 64>}, {pipeline_mode = #tpu.pipeline_mode<synchronous>, transform_indices = @transform_1, window_bounds = array<i64: 3, 64, 128>}, {pipeline_mode = #tpu.pipeline_mode<synchronous>, transform_indices = @transform_2, window_bounds = array<i64: 1, 128>}, {pipeline_mode = #tpu.pipeline_mode<synchronous>, transform_indices = @transform_3, window_bounds = array<i64: 3, 128, 64>}, {pipeline_mode = #tpu.pipeline_mode<synchronous>, transform_indices = @transform_4, window_bounds = array<i64: 1, 64>}, {transform_indices = @transform_5, window_bounds = array<i64: 1, 16, 64>}]} {
    %c0 = arith.constant 0 : index
    %c0_0 = arith.constant 0 : index
    %c0_1 = arith.constant 0 : index
    %0 = vector.load %arg1[%c0, %c0_0, %c0_1] : memref<1x16x64xf32, #tpu.memory_space<vmem>>, vector<1x16x64xf32>
    %1 = vector.shape_cast %0 : vector<1x16x64xf32> to vector<16x64xf32>
    %cst = arith.constant 0.000000e+00 : f32
    %2 = vector.broadcast %cst : f32 to vector<1x64xf32>
    %3 = tpu.concatenate %2, %1, %2 in 0 : vector<1x64xf32>, vector<16x64xf32>, vector<1x64xf32> -> vector<18x64xf32>
    %cst_2 = arith.constant 0.000000e+00 : f32
    %4 = vector.broadcast %cst_2 : f32 to vector<16x128xf32>
    %5 = vector.extract_strided_slice %3 {offsets = [0, 0], sizes = [16, 64], strides = [1, 1]} : vector<18x64xf32> to vector<16x64xf32>
    %c0_3 = arith.constant 0 : index
    %c0_4 = arith.constant 0 : index
    %c0_5 = arith.constant 0 : index
    %6 = vector.load %arg2[%c0_3, %c0_4, %c0_5] : memref<3x64x128xf32, #tpu.memory_space<vmem>>, vector<1x64x128xf32>
    %7 = vector.shape_cast %6 : vector<1x64x128xf32> to vector<64x128xf32>
    %cst_6 = arith.constant dense<0.000000e+00> : vector<16x128xf32>
    %8 = tpu.matmul %5, %7, %cst_6 {dimension_numbers = #tpu.dot_dimension_numbers<[1], [0], [0], [1], [0, 0, 1, 1], [], []>} : vector<16x64xf32>, vector<64x128xf32>, vector<16x128xf32> -> vector<16x128xf32>
    %9 = arith.addf %4, %8 : vector<16x128xf32>
    %10 = vector.extract_strided_slice %3 {offsets = [1, 0], sizes = [16, 64], strides = [1, 1]} : vector<18x64xf32> to vector<16x64xf32>
    %c1 = arith.constant 1 : index
    %c0_7 = arith.constant 0 : index
    %c0_8 = arith.constant 0 : index
    %11 = vector.load %arg2[%c1, %c0_7, %c0_8] : memref<3x64x128xf32, #tpu.memory_space<vmem>>, vector<1x64x128xf32>
    %12 = vector.shape_cast %11 : vector<1x64x128xf32> to vector<64x128xf32>
    %cst_9 = arith.constant dense<0.000000e+00> : vector<16x128xf32>
    %13 = tpu.matmul %10, %12, %cst_9 {dimension_numbers = #tpu.dot_dimension_numbers<[1], [0], [0], [1], [0, 0, 1, 1], [], []>} : vector<16x64xf32>, vector<64x128xf32>, vector<16x128xf32> -> vector<16x128xf32>
    %14 = arith.addf %9, %13 : vector<16x128xf32>
    %15 = vector.extract_strided_slice %3 {offsets = [2, 0], sizes = [16, 64], strides = [1, 1]} : vector<18x64xf32> to vector<16x64xf32>
    %c2 = arith.constant 2 : index
    %c0_10 = arith.constant 0 : index
    %c0_11 = arith.constant 0 : index
    %16 = vector.load %arg2[%c2, %c0_10, %c0_11] : memref<3x64x128xf32, #tpu.memory_space<vmem>>, vector<1x64x128xf32>
    %17 = vector.shape_cast %16 : vector<1x64x128xf32> to vector<64x128xf32>
    %cst_12 = arith.constant dense<0.000000e+00> : vector<16x128xf32>
    %18 = tpu.matmul %15, %17, %cst_12 {dimension_numbers = #tpu.dot_dimension_numbers<[1], [0], [0], [1], [0, 0, 1, 1], [], []>} : vector<16x64xf32>, vector<64x128xf32>, vector<16x128xf32> -> vector<16x128xf32>
    %19 = arith.addf %14, %18 : vector<16x128xf32>
    %c0_13 = arith.constant 0 : index
    %c0_14 = arith.constant 0 : index
    %20 = vector.load %arg3[%c0_13, %c0_14] : memref<1x128xf32, #tpu.memory_space<vmem>>, vector<1x128xf32>
    %21 = vector.broadcast %20 : vector<1x128xf32> to vector<16x128xf32>
    %22 = arith.addf %19, %21 : vector<16x128xf32>
    %cst_15 = arith.constant 0.000000e+00 : f32
    %23 = vector.broadcast %cst_15 : f32 to vector<16x128xf32>
    %24 = arith.maximumf %22, %23 : vector<16x128xf32>
    %cst_16 = arith.constant 0.000000e+00 : f32
    %25 = vector.broadcast %cst_16 : f32 to vector<1x128xf32>
    %26 = tpu.concatenate %25, %24, %25 in 0 : vector<1x128xf32>, vector<16x128xf32>, vector<1x128xf32> -> vector<18x128xf32>
    %cst_17 = arith.constant 0.000000e+00 : f32
    %27 = vector.broadcast %cst_17 : f32 to vector<16x64xf32>
    %28 = vector.extract_strided_slice %26 {offsets = [0, 0], sizes = [16, 128], strides = [1, 1]} : vector<18x128xf32> to vector<16x128xf32>
    %c0_18 = arith.constant 0 : index
    %c0_19 = arith.constant 0 : index
    %c0_20 = arith.constant 0 : index
    %29 = vector.load %arg4[%c0_18, %c0_19, %c0_20] : memref<3x128x64xf32, #tpu.memory_space<vmem>>, vector<1x128x64xf32>
    %30 = vector.shape_cast %29 : vector<1x128x64xf32> to vector<128x64xf32>
    %cst_21 = arith.constant dense<0.000000e+00> : vector<16x64xf32>
    %31 = tpu.matmul %28, %30, %cst_21 {dimension_numbers = #tpu.dot_dimension_numbers<[1], [0], [0], [1], [0, 0, 1, 1], [], []>} : vector<16x128xf32>, vector<128x64xf32>, vector<16x64xf32> -> vector<16x64xf32>
    %32 = arith.addf %27, %31 : vector<16x64xf32>
    %33 = vector.extract_strided_slice %26 {offsets = [1, 0], sizes = [16, 128], strides = [1, 1]} : vector<18x128xf32> to vector<16x128xf32>
    %c1_22 = arith.constant 1 : index
    %c0_23 = arith.constant 0 : index
    %c0_24 = arith.constant 0 : index
    %34 = vector.load %arg4[%c1_22, %c0_23, %c0_24] : memref<3x128x64xf32, #tpu.memory_space<vmem>>, vector<1x128x64xf32>
    %35 = vector.shape_cast %34 : vector<1x128x64xf32> to vector<128x64xf32>
    %cst_25 = arith.constant dense<0.000000e+00> : vector<16x64xf32>
    %36 = tpu.matmul %33, %35, %cst_25 {dimension_numbers = #tpu.dot_dimension_numbers<[1], [0], [0], [1], [0, 0, 1, 1], [], []>} : vector<16x128xf32>, vector<128x64xf32>, vector<16x64xf32> -> vector<16x64xf32>
    %37 = arith.addf %32, %36 : vector<16x64xf32>
    %38 = vector.extract_strided_slice %26 {offsets = [2, 0], sizes = [16, 128], strides = [1, 1]} : vector<18x128xf32> to vector<16x128xf32>
    %c2_26 = arith.constant 2 : index
    %c0_27 = arith.constant 0 : index
    %c0_28 = arith.constant 0 : index
    %39 = vector.load %arg4[%c2_26, %c0_27, %c0_28] : memref<3x128x64xf32, #tpu.memory_space<vmem>>, vector<1x128x64xf32>
    %40 = vector.shape_cast %39 : vector<1x128x64xf32> to vector<128x64xf32>
    %cst_29 = arith.constant dense<0.000000e+00> : vector<16x64xf32>
    %41 = tpu.matmul %38, %40, %cst_29 {dimension_numbers = #tpu.dot_dimension_numbers<[1], [0], [0], [1], [0, 0, 1, 1], [], []>} : vector<16x128xf32>, vector<128x64xf32>, vector<16x64xf32> -> vector<16x64xf32>
    %42 = arith.addf %37, %41 : vector<16x64xf32>
    %c0_30 = arith.constant 0 : index
    %c0_31 = arith.constant 0 : index
    %43 = vector.load %arg5[%c0_30, %c0_31] : memref<1x64xf32, #tpu.memory_space<vmem>>, vector<1x64xf32>
    %44 = vector.broadcast %43 : vector<1x64xf32> to vector<16x64xf32>
    %45 = arith.addf %42, %44 : vector<16x64xf32>
    %46 = arith.addf %1, %45 : vector<16x64xf32>
    %cst_32 = arith.constant 0.000000e+00 : f32
    %47 = vector.broadcast %cst_32 : f32 to vector<16x64xf32>
    %48 = arith.maximumf %46, %47 : vector<16x64xf32>
    %c0_33 = arith.constant 0 : index
    %c0_34 = arith.constant 0 : index
    %c0_35 = arith.constant 0 : index
    %49 = vector.load %arg6[%c0_33, %c0_34, %c0_35] : memref<1x16x64xf32, #tpu.memory_space<vmem>>, vector<1x16x64xf32>
    %50 = vector.shape_cast %49 : vector<1x16x64xf32> to vector<16x64xf32>
    %51 = vector.shape_cast %48 : vector<16x64xf32> to vector<1x16x64xf32>
    tpu.vector_store %arg6[%c0_33, %c0_34, %c0_35], %51 {strides = array<i32>} : memref<1x16x64xf32, #tpu.memory_space<vmem>>, vector<1x16x64xf32>,
    return
  }
  func.func @transform_0(%arg0: i32) -> (i32, i32, i32) {
    %c0_i32 = arith.constant 0 : i32
    %c0_i32_0 = arith.constant 0 : i32
    %c0_i32_1 = arith.constant 0 : i32
    return %arg0, %c0_i32, %c0_i32_0 : i32, i32, i32
  }
  func.func @transform_1(%arg0: i32) -> (i32, i32, i32) {
    %c0_i32 = arith.constant 0 : i32
    %c0_i32_0 = arith.constant 0 : i32
    %c0_i32_1 = arith.constant 0 : i32
    %c0_i32_2 = arith.constant 0 : i32
    return %c0_i32, %c0_i32_0, %c0_i32_1 : i32, i32, i32
  }
  func.func @transform_2(%arg0: i32) -> (i32, i32) {
    %c0_i32 = arith.constant 0 : i32
    %c0_i32_0 = arith.constant 0 : i32
    %c0_i32_1 = arith.constant 0 : i32
    return %c0_i32, %c0_i32_0 : i32, i32
  }
  func.func @transform_3(%arg0: i32) -> (i32, i32, i32) {
    %c0_i32 = arith.constant 0 : i32
    %c0_i32_0 = arith.constant 0 : i32
    %c0_i32_1 = arith.constant 0 : i32
    %c0_i32_2 = arith.constant 0 : i32
    return %c0_i32, %c0_i32_0, %c0_i32_1 : i32, i32, i32
  }
  func.func @transform_4(%arg0: i32) -> (i32, i32) {
    %c0_i32 = arith.constant 0 : i32
    %c0_i32_0 = arith.constant 0 : i32
    %c0_i32_1 = arith.constant 0 : i32
    return %c0_i32, %c0_i32_0 : i32, i32
  }
  func.func @transform_5(%arg0: i32) -> (i32, i32, i32) {
    %c0_i32 = arith.constant 0 : i32
    %c0_i32_0 = arith.constant 0 : i32
    %c0_i32_1 = arith.constant 0 : i32
    return %arg0, %c0_i32, %c0_i32_0 : i32, i32, i32
  }
}

</mosaic_0001>

<llo_original>
// kernel: tpu_custom_call.1
$region0: #{tpu_custom_call.1}
  #allocation0 [shape = 'u32[]', space=smem, size = 0x4, offset = 0x4, fixed_abs, tag = 'smem constant byte address 0x4 - core index']
  #allocation1 [shape = 'u32[144,128]{1,0:T(1,128)}', space=vmem, size = 0x12000, scoped, tag = 'internal scratch']
  %s0 = inlined_call_operand.vmem [shape: f32[2,16,64], index: 0, kind: input, shape index: {}]
  %s1 = inlined_call_operand.vmem [shape: f32[3,64,128], index: 1, kind: input, shape index: {}]
  %s2 = inlined_call_operand.vmem [shape: f32[1,128], index: 2, kind: input, shape index: {}]
  %s3 = inlined_call_operand.vmem [shape: f32[3,128,64], index: 3, kind: input, shape index: {}]
  %s4 = inlined_call_operand.vmem [shape: f32[1,64], index: 4, kind: input, shape index: {}]
  %s5 = inlined_call_operand.hbm [shape: f32[2,16,64], index: 5, kind: output, shape index: {}]
  %s6 = sld [smem:[#allocation0]]
  $region53: #{tpu_custom_call.1} parent=0
    _
  %s8 = ssub.s32 1, %s6
  %s9 = scalar_select 0, %s8, %s6
  $region1: #{tpu_custom_call.1} parent=0
    #allocation2 [shape = 'u8[16384]{0}', space=vmem, size = 0x4000, scoped, tag = 'output window, operand 0']
    #allocation3 [shape = 's32[2]{0}', space=sflag, size = 0x8, scoped, tag = 'scoped memory for tpu_custom_call.1']
    %10 = vsyncpa [#allocation3], 0
    %s11 = scalar_lea.sflag [#allocation3], 1
    %12 = vsyncpa %s11, 0
    loop: start=0, step=1, limit=4
    $region2: #{tpu_custom_call.1} parent=1 // loop_pre_header
      _
    $region3: #{tpu_custom_call.1} parent=1 // loop_header
      %s14 = sphi 0, %s18
      %p15 = scmp.ge.s32.totalorder %s14, 4
      %s24 = sphi 0, %s26
      %s27 = sphi 0, %s24
      %s28 = sphi 0, %s27
      %s44 = sphi 0, %s28
      %s48 = sphi 0, %s48
      %s50 = sphi 0, %s48
      %s51 = sphi 0, %s50
      %s65 = sphi 0, %s51
      %s69 = sphi 0, %s69
      %s71 = sphi 0, %s69
      %s72 = sphi 0, %s71
      %s86 = sphi 0, %s72
      %s90 = sphi 0, %s90
      %s92 = sphi 0, %s90
      %s93 = sphi 0, %s92
      %s107 = sphi 0, %s93
      %s111 = sphi 0, %s111
      %s113 = sphi 0, %s111
      %s114 = sphi 0, %s113
      %s128 = sphi 0, %s114
      %s134 = sphi 0, %s136
      %s137 = sphi 0, %s134
      %s138 = sphi 0, %s137
      %s154 = sphi 0, %s138
    $region4: #{tpu_custom_call.1} parent=1 // loop_header_branch
      %17 = sbr.rel (%p15) target = $region8
    $region5: #{tpu_custom_call.1} parent=1 // loop_body
      %s19 = ssub.s32 %s14, 1
      %s20 = ssub.s32 %s14, 2
      %s21 = sadd.s32 %s14, 1
      %s22 = ssub.s32 %s14, %s21
      %p23 = scmp.eq.s32.totalorder %s22, 0
      %s25 = sadd.s32 %s24, 1
      %s26 = scalar_select %p23, %s24, %s25
      %p29 = pneg %p23
      %p30 = scmp.eq.s32.totalorder %s14, 1
      %p31 = por %p29, %p30
      %p32 = scmp.ne.s32.totalorder %s24, %s27
      %p33 = scmp.eq.s32.totalorder %s14, 0
      %p34 = por %p32, %p33
      %p35 = scmp.ne.s32.totalorder %s24, %s27
      %p36 = scmp.eq.s32.totalorder %s19, 1
      %p37 = por %p35, %p36
      %p38 = scmp.ne.s32.totalorder %s27, %s28
      %p39 = scmp.eq.s32.totalorder %s19, 0
      %p40 = por %p38, %p39
      %p41 = scmp.ne.s32.totalorder %s27, %s28
      %p42 = scmp.eq.s32.totalorder %s20, 1
      %p43 = por %p41, %p42
      %p45 = scmp.ne.s32.totalorder %s28, %s44
      %p46 = scmp.eq.s32.totalorder %s20, 0
      %p47 = por %p45, %p46
      %s49 = sadd.s32 %s48, 1
      %p52 = scmp.eq.s32.totalorder %s14, 1
      %p53 = scmp.ne.s32.totalorder %s48, %s50
      %p54 = scmp.eq.s32.totalorder %s14, 0
      %p55 = por %p53, %p54
      %p56 = scmp.ne.s32.totalorder %s48, %s50
      %p57 = scmp.eq.s32.totalorder %s19, 1
      %p58 = por %p56, %p57
      %p59 = scmp.ne.s32.totalorder %s50, %s51
      %p60 = scmp.eq.s32.totalorder %s19, 0
      %p61 = por %p59, %p60
      %p62 = scmp.ne.s32.totalorder %s50, %s51
      %p63 = scmp.eq.s32.totalorder %s20, 1
      %p64 = por %p62, %p63
      %p66 = scmp.ne.s32.totalorder %s51, %s65
      %p67 = scmp.eq.s32.totalorder %s20, 0
      %p68 = por %p66, %p67
      %s70 = sadd.s32 %s69, 1
      %p73 = scmp.eq.s32.totalorder %s14, 1
      %p74 = scmp.ne.s32.totalorder %s69, %s71
      %p75 = scmp.eq.s32.totalorder %s14, 0
      %p76 = por %p74, %p75
      %p77 = scmp.ne.s32.totalorder %s69, %s71
      %p78 = scmp.eq.s32.totalorder %s19, 1
      %p79 = por %p77, %p78
      %p80 = scmp.ne.s32.totalorder %s71, %s72
      %p81 = scmp.eq.s32.totalorder %s19, 0
      %p82 = por %p80, %p81
      %p83 = scmp.ne.s32.totalorder %s71, %s72
      %p84 = scmp.eq.s32.totalorder %s20, 1
      %p85 = por %p83, %p84
      %p87 = scmp.ne.s32.totalorder %s72, %s86
      %p88 = scmp.eq.s32.totalorder %s20, 0
      %p89 = por %p87, %p88
      %s91 = sadd.s32 %s90, 1
      %p94 = scmp.eq.s32.totalorder %s14, 1
      %p95 = scmp.ne.s32.totalorder %s90, %s92
      %p96 = scmp.eq.s32.totalorder %s14, 0
      %p97 = por %p95, %p96
      %p98 = scmp.ne.s32.totalorder %s90, %s92
      %p99 = scmp.eq.s32.totalorder %s19, 1
      %p100 = por %p98, %p99
      %p101 = scmp.ne.s32.totalorder %s92, %s93
      %p102 = scmp.eq.s32.totalorder %s19, 0
      %p103 = por %p101, %p102
      %p104 = scmp.ne.s32.totalorder %s92, %s93
      %p105 = scmp.eq.s32.totalorder %s20, 1
      %p106 = por %p104, %p105
      %p108 = scmp.ne.s32.totalorder %s93, %s107
      %p109 = scmp.eq.s32.totalorder %s20, 0
      %p110 = por %p108, %p109
      %s112 = sadd.s32 %s111, 1
      %p115 = scmp.eq.s32.totalorder %s14, 1
      %p116 = scmp.ne.s32.totalorder %s111, %s113
      %p117 = scmp.eq.s32.totalorder %s14, 0
      %p118 = por %p116, %p117
      %p119 = scmp.ne.s32.totalorder %s111, %s113
      %p120 = scmp.eq.s32.totalorder %s19, 1
      %p121 = por %p119, %p120
      %p122 = scmp.ne.s32.totalorder %s113, %s114
      %p123 = scmp.eq.s32.totalorder %s19, 0
      %p124 = por %p122, %p123
      %p125 = scmp.ne.s32.totalorder %s113, %s114
      %p126 = scmp.eq.s32.totalorder %s20, 1
      %p127 = por %p125, %p126
      %p129 = scmp.ne.s32.totalorder %s114, %s128
      %p130 = scmp.eq.s32.totalorder %s20, 0
      %p131 = por %p129, %p130
      %s132 = ssub.s32 %s14, %s21
      %p133 = scmp.eq.s32.totalorder %s132, 0
      %s135 = sadd.s32 %s134, 1
      %s136 = scalar_select %p133, %s134, %s135
      %p139 = pneg %p133
      %p140 = scmp.eq.s32.totalorder %s14, 1
      %p141 = por %p139, %p140
      %p142 = scmp.ne.s32.totalorder %s134, %s137
      %p143 = scmp.eq.s32.totalorder %s14, 0
      %p144 = por %p142, %p143
      %p145 = scmp.ne.s32.totalorder %s134, %s137
      %p146 = scmp.eq.s32.totalorder %s19, 1
      %p147 = por %p145, %p146
      %p148 = scmp.ne.s32.totalorder %s137, %s138
      %p149 = scmp.eq.s32.totalorder %s19, 0
      %p150 = por %p148, %p149
      %p151 = scmp.ne.s32.totalorder %s137, %s138
      %p152 = scmp.eq.s32.totalorder %s20, 1
      %p153 = por %p151, %p152
      %p155 = scmp.ne.s32.totalorder %s138, %s154
      %p156 = scmp.eq.s32.totalorder %s20, 0
      %p157 = por %p155, %p156
      %p158 = scmp.le.s32.totalorder 1, %s14
      %p159 = scmp.lt.s32.totalorder %s14, 3
      %p160 = pnand %p158, %p159
      %p161 = pneg %p160
      // Predicated region
      $region9: #{tpu_custom_call.1} parent=5 // pred_check
        _
      $region10: #{tpu_custom_call.1} parent=5 // pred_check_branch
        %163 = sbr.rel (%p160) target = $region12
      $region11: #{tpu_custom_call.1} parent=5 // pred_region
        %s164 = ssub.s32 %s14, 1
        // Predicated region
        $region13: #{tpu_custom_call.1} parent=11 // pred_check
          %p165 = pneg %p61
        $region14: #{tpu_custom_call.1} parent=11 // pred_check_branch
          %167 = sbr.rel (%p165) target = $region16
        $region15: #{tpu_custom_call.1} parent=11 // pred_region
          _
        $region16: #{tpu_custom_call.1} parent=11 // pred_fallthru
          _
        // Predicated region
        $region17: #{tpu_custom_call.1} parent=11 // pred_check
          %p168 = pneg %p82
        $region18: #{tpu_custom_call.1} parent=11 // pred_check_branch
          %170 = sbr.rel (%p168) target = $region20
        $region19: #{tpu_custom_call.1} parent=11 // pred_region
          _
        $region20: #{tpu_custom_call.1} parent=11 // pred_fallthru
          _
        // Predicated region
        $region21: #{tpu_custom_call.1} parent=11 // pred_check
          %p171 = pneg %p103
        $region22: #{tpu_custom_call.1} parent=11 // pred_check_branch
          %173 = sbr.rel (%p171) target = $region24
        $region23: #{tpu_custom_call.1} parent=11 // pred_region
          _
        $region24: #{tpu_custom_call.1} parent=11 // pred_fallthru
          _
        // Predicated region
        $region25: #{tpu_custom_call.1} parent=11 // pred_check
          %p174 = pneg %p124
        $region26: #{tpu_custom_call.1} parent=11 // pred_check_branch
          %176 = sbr.rel (%p174) target = $region28
        $region27: #{tpu_custom_call.1} parent=11 // pred_region
          _
        $region28: #{tpu_custom_call.1} parent=11 // pred_fallthru
          _
      $region12: #{tpu_custom_call.1} parent=5 // pred_fallthru
        _
      %p177 = scmp.lt.s32.totalorder %s14, 2
      // Predicated region
      $region29: #{tpu_custom_call.1} parent=5 // pred_check
        %p178 = pneg %p177
      $region30: #{tpu_custom_call.1} parent=5 // pred_check_branch
        %180 = sbr.rel (%p178) target = $region32
      $region31: #{tpu_custom_call.1} parent=5 // pred_region
        // Predicated region
        $region33: #{tpu_custom_call.1} parent=31 // pred_check
          %p181 = pneg %p34
        $region34: #{tpu_custom_call.1} parent=31 // pred_check_branch
          %183 = sbr.rel (%p181) target = $region36
        $region35: #{tpu_custom_call.1} parent=31 // pred_region
          %p184 = scmp.lt.s32.totalorder %s14, 1
          %s185 = scalar_select %p184, %s14, 1
          %s186 = smul.addr %s185, 2
          %s187 = smul.addr %s186, 8
          %s188 = scalar_lea.vmem %s0, %s187
        $region36: #{tpu_custom_call.1} parent=31 // pred_fallthru
          _
      $region32: #{tpu_custom_call.1} parent=5 // pred_fallthru
        _
      %p189 = scmp.le.s32.totalorder 1, %s14
      %p190 = scmp.lt.s32.totalorder %s14, 3
      %p191 = pnand %p189, %p190
      %p192 = pneg %p191
      // Predicated region
      $region37: #{tpu_custom_call.1} parent=5 // pred_check
        _
      $region38: #{tpu_custom_call.1} parent=5 // pred_check_branch
        %194 = sbr.rel (%p191) target = $region40
      $region39: #{tpu_custom_call.1} parent=5 // pred_region
        %s195 = ssub.s32 %s14, 1
        %p196 = scmp.lt.s32.totalorder %s19, 1
        %s197 = scalar_select %p196, %s19, 1
        %s198 = smul.addr %s197, 2
        %s199 = smul.addr %s198, 8
        %s200 = scalar_lea.vmem %s0, %s199
        %p201 = pneg %p40
        %p202 = pneg %p37
        %p203 = pneg %p61
        %p204 = pneg %p58
        %p205 = pneg %p82
        %p206 = pneg %p79
        %p207 = pneg %p103
        %p208 = pneg %p100
        %p209 = pneg %p124
        %p210 = pneg %p121
        %p211 = pneg %p150
        %p212 = pneg %p147
        %s213 = sand.u32 %s137, 1
        %s214 = scalar_lea.sflag [#allocation3], %s213
        %s215 = sand.u32 %s137, 1
        %s216 = smul.addr %s215, 16
        %s217 = scalar_lea.vmem [#allocation2], %s216
        %p218 = scmp.lt.s32.totalorder %s19, 1
        %s219 = scalar_select %p218, %s19, 1
        %s220 = smul.addr %s219, 2
        %s221 = smul.addr %s220, 8
        %s222 = scalar_lea.vmem %s0, %s221
        %v223 = vld [vmem:[%s222] sm:$0xff]
        %v224 = vld [vmem:[%s222 + $0x8] sm:$0xff]
        %vm227 = vcmask 1040384
        %v228 = vrot.slane %v223, 7
        %v229 = vrot.slane %v224, 7
        %v230 = vsel %vm227, %v228, %v229
        %v233 = vsel %vm227, 0.0, %v228
        %v234 = vsel %vm227, %v229, 0.0
        %v235 = vld [vmem:[%s1] sm:$0xff]
        %v236 = vld [vmem:[%s1 + $0x8] sm:$0xff]
        %v237 = vld [vmem:[%s1 + $0x10] sm:$0xff]
        %v238 = vld [vmem:[%s1 + $0x18] sm:$0xff]
        %v239 = vld [vmem:[%s1 + $0x20] sm:$0xff]
        %v240 = vld [vmem:[%s1 + $0x28] sm:$0xff]
        %v241 = vld [vmem:[%s1 + $0x30] sm:$0xff]
        %v242 = vld [vmem:[%s1 + $0x38] sm:$0xff]
        %s243 = scalar_lea.vmem %s1, 64
        %v244 = vld [vmem:[%s243] sm:$0xff]
        %v245 = vld [vmem:[%s243 + $0x8] sm:$0xff]
        %v246 = vld [vmem:[%s243 + $0x10] sm:$0xff]
        %v247 = vld [vmem:[%s243 + $0x18] sm:$0xff]
        %v248 = vld [vmem:[%s243 + $0x20] sm:$0xff]
        %v249 = vld [vmem:[%s243 + $0x28] sm:$0xff]
        %v250 = vld [vmem:[%s243 + $0x30] sm:$0xff]
        %v251 = vld [vmem:[%s243 + $0x38] sm:$0xff]
        %vm254 = vcmask 1046528
        %v255 = vrot.slane %v233, 1
        %v256 = vrot.slane %v230, 1
        %v257 = vsel %vm254, %v255, %v256
        %v258 = vrot.slane %v234, 1
        %v259 = vsel %vm254, %v256, %v258
        %vm260 = vcmask 523264
        %v261 = vsel %vm260, %v257, 0
        %v263 = vsel %vm260, %v259, 0
        %265 = vmatprep.subr.mxu0 0.0
        %266 = vmatpush1.msra.mxu0 0.0
        %267 = vmatprep.subr.mxu0 0.0
        %268 = vmatpush1.msra.mxu0 0.0
        %269 = vmatprep.subr.mxu0 0.0
        %270 = vmatpush1.msra.mxu0 0.0
        %271 = vmatprep.subr.mxu0 0.0
        %272 = vmatpush1.msra.mxu0 0.0
        %273 = vmatprep.subr.mxu0 0.0
        %274 = vmatpush1.msra.mxu0 0.0
        %275 = vmatprep.subr.mxu0 0.0
        %276 = vmatpush1.msra.mxu0 0.0
        %277 = vmatprep.subr.mxu0 0.0
        %278 = vmatpush1.msra.mxu0 0.0
        %279 = vmatprep.subr.mxu0 0.0
        %280 = vmatpush1.msra.mxu0 0.0
        %281 = vmatprep.subr.mxu0 0.0
        %282 = vmatpush1.msra.mxu0 %v251
        %283 = vmatprep.subr.mxu0 0.0
        %284 = vmatpush1.msra.mxu0 %v250
        %285 = vmatprep.subr.mxu0 0.0
        %286 = vmatpush1.msra.mxu0 %v249
        %287 = vmatprep.subr.mxu0 0.0
        %288 = vmatpush1.msra.mxu0 %v248
        %289 = vmatprep.subr.mxu0 0.0
        %290 = vmatpush1.msra.mxu0 %v247
        %291 = vmatprep.subr.mxu0 0.0
        %292 = vmatpush1.msra.mxu0 %v246
        %293 = vmatprep.subr.mxu0 0.0
        %294 = vmatpush1.msra.mxu0 %v245
        %295 = vmatprep.subr.mxu0 0.0
        %296 = vmatpush1.msra.mxu0 %v244
        %297 = vmatprep.subr.mxu0 0.0
        %298 = vmatpush2.msra.mxu0 0.0
        %299 = vmatprep.subr.mxu0 0.0
        %300 = vmatpush2.msra.mxu0 0.0
        %301 = vmatprep.subr.mxu0 0.0
        %302 = vmatpush2.msra.mxu0 0.0
        %303 = vmatprep.subr.mxu0 0.0
        %304 = vmatpush2.msra.mxu0 0.0
        %305 = vmatprep.subr.mxu0 0.0
        %306 = vmatpush2.msra.mxu0 0.0
        %307 = vmatprep.subr.mxu0 0.0
        %308 = vmatpush2.msra.mxu0 0.0
        %309 = vmatprep.subr.mxu0 0.0
        %310 = vmatpush2.msra.mxu0 0.0
        %311 = vmatprep.subr.mxu0 0.0
        %312 = vmatpush2.msra.mxu0 0.0
        %313 = vmatprep.subr.mxu0 0.0
        %314 = vmatpush2.msra.mxu0 0.0
        %315 = vmatprep.subr.mxu0 0.0
        %316 = vmatpush2.msra.mxu0 0.0
        %317 = vmatprep.subr.mxu0 0.0
        %318 = vmatpush2.msra.mxu0 0.0
        %319 = vmatprep.subr.mxu0 0.0
        %320 = vmatpush2.msra.mxu0 0.0
        %321 = vmatprep.subr.mxu0 0.0
        %322 = vmatpush2.msra.mxu0 0.0
        %323 = vmatprep.subr.mxu0 0.0
        %324 = vmatpush2.msra.mxu0 0.0
        %325 = vmatprep.subr.mxu0 0.0
        %326 = vmatpush2.msra.mxu0 0.0
        %327 = vmatprep.subr.mxu0 0.0
        %328 = vmatpush2.msra.mxu0 0.0
        %329 = vmatprep.mubr.f32.mxu0 0.0
        %330 = vmatmul.mubr.f32.gmra.mxu0 %v261
        %v331 = vpop.f32.mrf.mxu0
        %v332 = vadd.f32 0.0, %v331
        %v333 = vpop.f32.mrf.mxu0
        %334 = vmatprep.mubr.f32.mxu0 0.0
        %335 = vmatmul.mubr.f32.gmra.mxu0 %v263
        %v336 = vpop.f32.mrf.mxu0
        %v337 = vadd.f32 0.0, %v336
        %v338 = vpop.f32.mrf.mxu0
        %339 = vdwg.mxu0
        %v340 = vsel %vm260, %v233, 0
        %v342 = vsel %vm260, %v230, 0
        %344 = vmatprep.subr.mxu0 0.0
        %345 = vmatpush1.msra.mxu0 0.0
        %346 = vmatprep.subr.mxu0 0.0
        %347 = vmatpush1.msra.mxu0 0.0
        %348 = vmatprep.subr.mxu0 0.0
        %349 = vmatpush1.msra.mxu0 0.0
        %350 = vmatprep.subr.mxu0 0.0
        %351 = vmatpush1.msra.mxu0 0.0
        %352 = vmatprep.subr.mxu0 0.0
        %353 = vmatpush1.msra.mxu0 0.0
        %354 = vmatprep.subr.mxu0 0.0
        %355 = vmatpush1.msra.mxu0 0.0
        %356 = vmatprep.subr.mxu0 0.0
        %357 = vmatpush1.msra.mxu0 0.0
        %358 = vmatprep.subr.mxu0 0.0
        %359 = vmatpush1.msra.mxu0 0.0
        %360 = vmatprep.subr.mxu0 0.0
        %361 = vmatpush1.msra.mxu0 %v242
        %362 = vmatprep.subr.mxu0 0.0
        %363 = vmatpush1.msra.mxu0 %v241
        %364 = vmatprep.subr.mxu0 0.0
        %365 = vmatpush1.msra.mxu0 %v240
        %366 = vmatprep.subr.mxu0 0.0
        %367 = vmatpush1.msra.mxu0 %v239
        %368 = vmatprep.subr.mxu0 0.0
        %369 = vmatpush1.msra.mxu0 %v238
        %370 = vmatprep.subr.mxu0 0.0
        %371 = vmatpush1.msra.mxu0 %v237
        %372 = vmatprep.subr.mxu0 0.0
        %373 = vmatpush1.msra.mxu0 %v236
        %374 = vmatprep.subr.mxu0 0.0
        %375 = vmatpush1.msra.mxu0 %v235
        %376 = vmatprep.subr.mxu0 0.0
        %377 = vmatpush2.msra.mxu0 0.0
        %378 = vmatprep.subr.mxu0 0.0
        %379 = vmatpush2.msra.mxu0 0.0
        %380 = vmatprep.subr.mxu0 0.0
        %381 = vmatpush2.msra.mxu0 0.0
        %382 = vmatprep.subr.mxu0 0.0
        %383 = vmatpush2.msra.mxu0 0.0
        %384 = vmatprep.subr.mxu0 0.0
        %385 = vmatpush2.msra.mxu0 0.0
        %386 = vmatprep.subr.mxu0 0.0
        %387 = vmatpush2.msra.mxu0 0.0
        %388 = vmatprep.subr.mxu0 0.0
        %389 = vmatpush2.msra.mxu0 0.0
        %390 = vmatprep.subr.mxu0 0.0
        %391 = vmatpush2.msra.mxu0 0.0
        %392 = vmatprep.subr.mxu0 0.0
        %393 = vmatpush2.msra.mxu0 0.0
        %394 = vmatprep.subr.mxu0 0.0
        %395 = vmatpush2.msra.mxu0 0.0
        %396 = vmatprep.subr.mxu0 0.0
        %397 = vmatpush2.msra.mxu0 0.0
        %398 = vmatprep.subr.mxu0 0.0
        %399 = vmatpush2.msra.mxu0 0.0
        %400 = vmatprep.subr.mxu0 0.0
        %401 = vmatpush2.msra.mxu0 0.0
        %402 = vmatprep.subr.mxu0 0.0
        %403 = vmatpush2.msra.mxu0 0.0
        %404 = vmatprep.subr.mxu0 0.0
        %405 = vmatpush2.msra.mxu0 0.0
        %406 = vmatprep.subr.mxu0 0.0
        %407 = vmatpush2.msra.mxu0 0.0
        %408 = vmatprep.mubr.f32.mxu0 0.0
        %409 = vmatmul.mubr.f32.gmra.mxu0 %v340
        %v410 = vpop.f32.mrf.mxu0
        %v411 = vadd.f32 %v332, %v410
        %v412 = vpop.f32.mrf.mxu0
        %413 = vmatprep.mubr.f32.mxu0 0.0
        %414 = vmatmul.mubr.f32.gmra.mxu0 %v342
        %v415 = vpop.f32.mrf.mxu0
        %v416 = vadd.f32 %v337, %v415
        %v417 = vpop.f32.mrf.mxu0
        %418 = vdwg.mxu0
        %s419 = scalar_lea.vmem %s1, 128
        %v420 = vld [vmem:[%s419] sm:$0xff]
        %v421 = vld [vmem:[%s419 + $0x8] sm:$0xff]
        %v422 = vld [vmem:[%s419 + $0x10] sm:$0xff]
        %v423 = vld [vmem:[%s419 + $0x18] sm:$0xff]
        %v424 = vld [vmem:[%s419 + $0x20] sm:$0xff]
        %v425 = vld [vmem:[%s419 + $0x28] sm:$0xff]
        %v426 = vld [vmem:[%s419 + $0x30] sm:$0xff]
        %v427 = vld [vmem:[%s419 + $0x38] sm:$0xff]
        %vm428 = vcmask 1045504
        %v429 = vrot.slane %v233, 2
        %v430 = vrot.slane %v230, 2
        %v431 = vsel %vm428, %v429, %v430
        %v432 = vrot.slane %v234, 2
        %v433 = vsel %vm428, %v430, %v432
        %v434 = vsel %vm260, %v431, 0
        %v436 = vsel %vm260, %v433, 0
        %438 = vmatprep.subr.mxu0 0.0
        %439 = vmatpush1.msra.mxu0 0.0
        %440 = vmatprep.subr.mxu0 0.0
        %441 = vmatpush1.msra.mxu0 0.0
        %442 = vmatprep.subr.mxu0 0.0
        %443 = vmatpush1.msra.mxu0 0.0
        %444 = vmatprep.subr.mxu0 0.0
        %445 = vmatpush1.msra.mxu0 0.0
        %446 = vmatprep.subr.mxu0 0.0
        %447 = vmatpush1.msra.mxu0 0.0
        %448 = vmatprep.subr.mxu0 0.0
        %449 = vmatpush1.msra.mxu0 0.0
        %450 = vmatprep.subr.mxu0 0.0
        %451 = vmatpush1.msra.mxu0 0.0
        %452 = vmatprep.subr.mxu0 0.0
        %453 = vmatpush1.msra.mxu0 0.0
        %454 = vmatprep.subr.mxu0 0.0
        %455 = vmatpush1.msra.mxu0 %v427
        %456 = vmatprep.subr.mxu0 0.0
        %457 = vmatpush1.msra.mxu0 %v426
        %458 = vmatprep.subr.mxu0 0.0
        %459 = vmatpush1.msra.mxu0 %v425
        %460 = vmatprep.subr.mxu0 0.0
        %461 = vmatpush1.msra.mxu0 %v424
        %462 = vmatprep.subr.mxu0 0.0
        %463 = vmatpush1.msra.mxu0 %v423
        %464 = vmatprep.subr.mxu0 0.0
        %465 = vmatpush1.msra.mxu0 %v422
        %466 = vmatprep.subr.mxu0 0.0
        %467 = vmatpush1.msra.mxu0 %v421
        %468 = vmatprep.subr.mxu0 0.0
        %469 = vmatpush1.msra.mxu0 %v420
        %470 = vmatprep.subr.mxu0 0.0
        %471 = vmatpush2.msra.mxu0 0.0
        %472 = vmatprep.subr.mxu0 0.0
        %473 = vmatpush2.msra.mxu0 0.0
        %474 = vmatprep.subr.mxu0 0.0
        %475 = vmatpush2.msra.mxu0 0.0
        %476 = vmatprep.subr.mxu0 0.0
        %477 = vmatpush2.msra.mxu0 0.0
        %478 = vmatprep.subr.mxu0 0.0
        %479 = vmatpush2.msra.mxu0 0.0
        %480 = vmatprep.subr.mxu0 0.0
        %481 = vmatpush2.msra.mxu0 0.0
        %482 = vmatprep.subr.mxu0 0.0
        %483 = vmatpush2.msra.mxu0 0.0
        %484 = vmatprep.subr.mxu0 0.0
        %485 = vmatpush2.msra.mxu0 0.0
        %486 = vmatprep.subr.mxu0 0.0
        %487 = vmatpush2.msra.mxu0 0.0
        %488 = vmatprep.subr.mxu0 0.0
        %489 = vmatpush2.msra.mxu0 0.0
        %490 = vmatprep.subr.mxu0 0.0
        %491 = vmatpush2.msra.mxu0 0.0
        %492 = vmatprep.subr.mxu0 0.0
        %493 = vmatpush2.msra.mxu0 0.0
        %494 = vmatprep.subr.mxu0 0.0
        %495 = vmatpush2.msra.mxu0 0.0
        %496 = vmatprep.subr.mxu0 0.0
        %497 = vmatpush2.msra.mxu0 0.0
        %498 = vmatprep.subr.mxu0 0.0
        %499 = vmatpush2.msra.mxu0 0.0
        %500 = vmatprep.subr.mxu0 0.0
        %501 = vmatpush2.msra.mxu0 0.0
        %502 = vmatprep.mubr.f32.mxu0 0.0
        %503 = vmatmul.mubr.f32.gmra.mxu0 %v434
        %v504 = vpop.f32.mrf.mxu0
        %v505 = vadd.f32 0.0, %v504
        %v506 = vpop.f32.mrf.mxu0
        %507 = vmatprep.mubr.f32.mxu0 0.0
        %508 = vmatmul.mubr.f32.gmra.mxu0 %v436
        %v509 = vpop.f32.mrf.mxu0
        %v510 = vadd.f32 0.0, %v509
        %v511 = vpop.f32.mrf.mxu0
        %512 = vdwg.mxu0
        %v513 = vadd.f32 %v411, %v505
        %v514 = vadd.f32 %v416, %v510
        %v515 = vld [vmem:[%s2] sm:$0x1]
        %v517 = vlaneseq
        %v518 = vshrl.u32 %v517, 7
        %v519 = vsub.s32 0, %v518
        %v520 = vrot.slane %v515, %v519
        %v522 = vadd.f32 %v513, %v520
        %v523 = vadd.f32 %v514, %v520
        %v524 = vmax.f32 %v522, 0.0
        %v525 = vmax.f32 %v523, 0.0
        %v528 = vrot.slane %v524, 7
        %v529 = vrot.slane %v525, 7
        %v530 = vsel %vm227, %v528, %v529
        %v534 = vsel %vm227, 0.0, %v528
        %v535 = vsel %vm227, %v529, 0.0
        %v536 = vld [vmem:[%s3] sm:$0xff]
        %v537 = vld [vmem:[%s3 + $0x8] sm:$0xff]
        %v538 = vld [vmem:[%s3 + $0x10] sm:$0xff]
        %v539 = vld [vmem:[%s3 + $0x18] sm:$0xff]
        %v540 = vld [vmem:[%s3 + $0x20] sm:$0xff]
        %v541 = vld [vmem:[%s3 + $0x28] sm:$0xff]
        %v542 = vld [vmem:[%s3 + $0x30] sm:$0xff]
        %v543 = vld [vmem:[%s3 + $0x38] sm:$0xff]
        %v544 = vld [vmem:[%s3 + $0x40] sm:$0xff]
        %v545 = vld [vmem:[%s3 + $0x48] sm:$0xff]
        %v546 = vld [vmem:[%s3 + $0x50] sm:$0xff]
        %v547 = vld [vmem:[%s3 + $0x58] sm:$0xff]
        %v548 = vld [vmem:[%s3 + $0x60] sm:$0xff]
        %v549 = vld [vmem:[%s3 + $0x68] sm:$0xff]
        %v550 = vld [vmem:[%s3 + $0x70] sm:$0xff]
        %v551 = vld [vmem:[%s3 + $0x78] sm:$0xff]
        %s552 = scalar_lea.vmem %s3, 128
        %v553 = vld [vmem:[%s552] sm:$0xff]
        %v554 = vld [vmem:[%s552 + $0x8] sm:$0xff]
        %v555 = vld [vmem:[%s552 + $0x10] sm:$0xff]
        %v556 = vld [vmem:[%s552 + $0x18] sm:$0xff]
        %v557 = vld [vmem:[%s552 + $0x20] sm:$0xff]
        %v558 = vld [vmem:[%s552 + $0x28] sm:$0xff]
        %v559 = vld [vmem:[%s552 + $0x30] sm:$0xff]
        %v560 = vld [vmem:[%s552 + $0x38] sm:$0xff]
        %v561 = vld [vmem:[%s552 + $0x40] sm:$0xff]
        %v562 = vld [vmem:[%s552 + $0x48] sm:$0xff]
        %v563 = vld [vmem:[%s552 + $0x50] sm:$0xff]
        %v564 = vld [vmem:[%s552 + $0x58] sm:$0xff]
        %v565 = vld [vmem:[%s552 + $0x60] sm:$0xff]
        %v566 = vld [vmem:[%s552 + $0x68] sm:$0xff]
        %v567 = vld [vmem:[%s552 + $0x70] sm:$0xff]
        %v568 = vld [vmem:[%s552 + $0x78] sm:$0xff]
        %v571 = vrot.slane %v534, 1
        %v572 = vrot.slane %v530, 1
        %v573 = vsel %vm254, %v571, %v572
        %v574 = vrot.slane %v535, 1
        %v575 = vsel %vm254, %v572, %v574
        %578 = vmatprep.subr.mxu0 0.0
        %579 = vmatpush1.msra.mxu0 %v568
        %580 = vmatprep.subr.mxu0 0.0
        %581 = vmatpush1.msra.mxu0 %v567
        %582 = vmatprep.subr.mxu0 0.0
        %583 = vmatpush1.msra.mxu0 %v566
        %584 = vmatprep.subr.mxu0 0.0
        %585 = vmatpush1.msra.mxu0 %v565
        %586 = vmatprep.subr.mxu0 0.0
        %587 = vmatpush1.msra.mxu0 %v564
        %588 = vmatprep.subr.mxu0 0.0
        %589 = vmatpush1.msra.mxu0 %v563
        %590 = vmatprep.subr.mxu0 0.0
        %591 = vmatpush1.msra.mxu0 %v562
        %592 = vmatprep.subr.mxu0 0.0
        %593 = vmatpush1.msra.mxu0 %v561
        %594 = vmatprep.subr.mxu0 0.0
        %595 = vmatpush1.msra.mxu0 %v560
        %596 = vmatprep.subr.mxu0 0.0
        %597 = vmatpush1.msra.mxu0 %v559
        %598 = vmatprep.subr.mxu0 0.0
        %599 = vmatpush1.msra.mxu0 %v558
        %600 = vmatprep.subr.mxu0 0.0
        %601 = vmatpush1.msra.mxu0 %v557
        %602 = vmatprep.subr.mxu0 0.0
        %603 = vmatpush1.msra.mxu0 %v556
        %604 = vmatprep.subr.mxu0 0.0
        %605 = vmatpush1.msra.mxu0 %v555
        %606 = vmatprep.subr.mxu0 0.0
        %607 = vmatpush1.msra.mxu0 %v554
        %608 = vmatprep.subr.mxu0 0.0
        %609 = vmatpush1.msra.mxu0 %v553
        %610 = vmatprep.subr.mxu0 0.0
        %611 = vmatpush2.msra.mxu0 0.0
        %612 = vmatprep.subr.mxu0 0.0
        %613 = vmatpush2.msra.mxu0 0.0
        %614 = vmatprep.subr.mxu0 0.0
        %615 = vmatpush2.msra.mxu0 0.0
        %616 = vmatprep.subr.mxu0 0.0
        %617 = vmatpush2.msra.mxu0 0.0
        %618 = vmatprep.subr.mxu0 0.0
        %619 = vmatpush2.msra.mxu0 0.0
        %620 = vmatprep.subr.mxu0 0.0
        %621 = vmatpush2.msra.mxu0 0.0
        %622 = vmatprep.subr.mxu0 0.0
        %623 = vmatpush2.msra.mxu0 0.0
        %624 = vmatprep.subr.mxu0 0.0
        %625 = vmatpush2.msra.mxu0 0.0
        %626 = vmatprep.subr.mxu0 0.0
        %627 = vmatpush2.msra.mxu0 0.0
        %628 = vmatprep.subr.mxu0 0.0
        %629 = vmatpush2.msra.mxu0 0.0
        %630 = vmatprep.subr.mxu0 0.0
        %631 = vmatpush2.msra.mxu0 0.0
        %632 = vmatprep.subr.mxu0 0.0
        %633 = vmatpush2.msra.mxu0 0.0
        %634 = vmatprep.subr.mxu0 0.0
        %635 = vmatpush2.msra.mxu0 0.0
        %636 = vmatprep.subr.mxu0 0.0
        %637 = vmatpush2.msra.mxu0 0.0
        %638 = vmatprep.subr.mxu0 0.0
        %639 = vmatpush2.msra.mxu0 0.0
        %640 = vmatprep.subr.mxu0 0.0
        %641 = vmatpush2.msra.mxu0 0.0
        %642 = vmatprep.mubr.f32.mxu0 0.0
        %643 = vmatmul.mubr.f32.gmra.mxu0 %v573
        %v644 = vpop.f32.mrf.mxu0
        %v645 = vadd.f32 0.0, %v644
        %v646 = vpop.f32.mrf.mxu0
        %647 = vmatprep.mubr.f32.mxu0 0.0
        %648 = vmatmul.mubr.f32.gmra.mxu0 %v575
        %v649 = vpop.f32.mrf.mxu0
        %v650 = vadd.f32 0.0, %v649
        %v651 = vpop.f32.mrf.mxu0
        %652 = vdwg.mxu0
        %653 = vmatprep.subr.mxu0 0.0
        %654 = vmatpush1.msra.mxu0 %v551
        %655 = vmatprep.subr.mxu0 0.0
        %656 = vmatpush1.msra.mxu0 %v550
        %657 = vmatprep.subr.mxu0 0.0
        %658 = vmatpush1.msra.mxu0 %v549
        %659 = vmatprep.subr.mxu0 0.0
        %660 = vmatpush1.msra.mxu0 %v548
        %661 = vmatprep.subr.mxu0 0.0
        %662 = vmatpush1.msra.mxu0 %v547
        %663 = vmatprep.subr.mxu0 0.0
        %664 = vmatpush1.msra.mxu0 %v546
        %665 = vmatprep.subr.mxu0 0.0
        %666 = vmatpush1.msra.mxu0 %v545
        %667 = vmatprep.subr.mxu0 0.0
        %668 = vmatpush1.msra.mxu0 %v544
        %669 = vmatprep.subr.mxu0 0.0
        %670 = vmatpush1.msra.mxu0 %v543
        %671 = vmatprep.subr.mxu0 0.0
        %672 = vmatpush1.msra.mxu0 %v542
        %673 = vmatprep.subr.mxu0 0.0
        %674 = vmatpush1.msra.mxu0 %v541
        %675 = vmatprep.subr.mxu0 0.0
        %676 = vmatpush1.msra.mxu0 %v540
        %677 = vmatprep.subr.mxu0 0.0
        %678 = vmatpush1.msra.mxu0 %v539
        %679 = vmatprep.subr.mxu0 0.0
        %680 = vmatpush1.msra.mxu0 %v538
        %681 = vmatprep.subr.mxu0 0.0
        %682 = vmatpush1.msra.mxu0 %v537
        %683 = vmatprep.subr.mxu0 0.0
        %684 = vmatpush1.msra.mxu0 %v536
        %685 = vmatprep.subr.mxu0 0.0
        %686 = vmatpush2.msra.mxu0 0.0
        %687 = vmatprep.subr.mxu0 0.0
        %688 = vmatpush2.msra.mxu0 0.0
        %689 = vmatprep.subr.mxu0 0.0
        %690 = vmatpush2.msra.mxu0 0.0
        %691 = vmatprep.subr.mxu0 0.0
        %692 = vmatpush2.msra.mxu0 0.0
        %693 = vmatprep.subr.mxu0 0.0
        %694 = vmatpush2.msra.mxu0 0.0
        %695 = vmatprep.subr.mxu0 0.0
        %696 = vmatpush2.msra.mxu0 0.0
        %697 = vmatprep.subr.mxu0 0.0
        %698 = vmatpush2.msra.mxu0 0.0
        %699 = vmatprep.subr.mxu0 0.0
        %700 = vmatpush2.msra.mxu0 0.0
        %701 = vmatprep.subr.mxu0 0.0
        %702 = vmatpush2.msra.mxu0 0.0
        %703 = vmatprep.subr.mxu0 0.0
        %704 = vmatpush2.msra.mxu0 0.0
        %705 = vmatprep.subr.mxu0 0.0
        %706 = vmatpush2.msra.mxu0 0.0
        %707 = vmatprep.subr.mxu0 0.0
        %708 = vmatpush2.msra.mxu0 0.0
        %709 = vmatprep.subr.mxu0 0.0
        %710 = vmatpush2.msra.mxu0 0.0
        %711 = vmatprep.subr.mxu0 0.0
        %712 = vmatpush2.msra.mxu0 0.0
        %713 = vmatprep.subr.mxu0 0.0
        %714 = vmatpush2.msra.mxu0 0.0
        %715 = vmatprep.subr.mxu0 0.0
        %716 = vmatpush2.msra.mxu0 0.0
        %717 = vmatprep.mubr.f32.mxu0 0.0
        %718 = vmatmul.mubr.f32.gmra.mxu0 %v534
        %v719 = vpop.f32.mrf.mxu0
        %v720 = vadd.f32 %v645, %v719
        %v721 = vpop.f32.mrf.mxu0
        %722 = vmatprep.mubr.f32.mxu0 0.0
        %723 = vmatmul.mubr.f32.gmra.mxu0 %v530
        %v724 = vpop.f32.mrf.mxu0
        %v725 = vadd.f32 %v650, %v724
        %v726 = vpop.f32.mrf.mxu0
        %727 = vdwg.mxu0
        %s728 = scalar_lea.vmem %s3, 256
        %v729 = vld [vmem:[%s728] sm:$0xff]
        %v730 = vld [vmem:[%s728 + $0x8] sm:$0xff]
        %v731 = vld [vmem:[%s728 + $0x10] sm:$0xff]
        %v732 = vld [vmem:[%s728 + $0x18] sm:$0xff]
        %v733 = vld [vmem:[%s728 + $0x20] sm:$0xff]
        %v734 = vld [vmem:[%s728 + $0x28] sm:$0xff]
        %v735 = vld [vmem:[%s728 + $0x30] sm:$0xff]
        %v736 = vld [vmem:[%s728 + $0x38] sm:$0xff]
        %v737 = vld [vmem:[%s728 + $0x40] sm:$0xff]
        %v738 = vld [vmem:[%s728 + $0x48] sm:$0xff]
        %v739 = vld [vmem:[%s728 + $0x50] sm:$0xff]
        %v740 = vld [vmem:[%s728 + $0x58] sm:$0xff]
        %v741 = vld [vmem:[%s728 + $0x60] sm:$0xff]
        %v742 = vld [vmem:[%s728 + $0x68] sm:$0xff]
        %v743 = vld [vmem:[%s728 + $0x70] sm:$0xff]
        %v744 = vld [vmem:[%s728 + $0x78] sm:$0xff]
        %v745 = vrot.slane %v534, 2
        %v746 = vrot.slane %v530, 2
        %v747 = vsel %vm428, %v745, %v746
        %v748 = vrot.slane %v535, 2
        %v749 = vsel %vm428, %v746, %v748
        %752 = vmatprep.subr.mxu0 0.0
        %753 = vmatpush1.msra.mxu0 %v744
        %754 = vmatprep.subr.mxu0 0.0
        %755 = vmatpush1.msra.mxu0 %v743
        %756 = vmatprep.subr.mxu0 0.0
        %757 = vmatpush1.msra.mxu0 %v742
        %758 = vmatprep.subr.mxu0 0.0
        %759 = vmatpush1.msra.mxu0 %v741
        %760 = vmatprep.subr.mxu0 0.0
        %761 = vmatpush1.msra.mxu0 %v740
        %762 = vmatprep.subr.mxu0 0.0
        %763 = vmatpush1.msra.mxu0 %v739
        %764 = vmatprep.subr.mxu0 0.0
        %765 = vmatpush1.msra.mxu0 %v738
        %766 = vmatprep.subr.mxu0 0.0
        %767 = vmatpush1.msra.mxu0 %v737
        %768 = vmatprep.subr.mxu0 0.0
        %769 = vmatpush1.msra.mxu0 %v736
        %770 = vmatprep.subr.mxu0 0.0
        %771 = vmatpush1.msra.mxu0 %v735
        %772 = vmatprep.subr.mxu0 0.0
        %773 = vmatpush1.msra.mxu0 %v734
        %774 = vmatprep.subr.mxu0 0.0
        %775 = vmatpush1.msra.mxu0 %v733
        %776 = vmatprep.subr.mxu0 0.0
        %777 = vmatpush1.msra.mxu0 %v732
        %778 = vmatprep.subr.mxu0 0.0
        %779 = vmatpush1.msra.mxu0 %v731
        %780 = vmatprep.subr.mxu0 0.0
        %781 = vmatpush1.msra.mxu0 %v730
        %782 = vmatprep.subr.mxu0 0.0
        %783 = vmatpush1.msra.mxu0 %v729
        %784 = vmatprep.subr.mxu0 0.0
        %785 = vmatpush2.msra.mxu0 0.0
        %786 = vmatprep.subr.mxu0 0.0
        %787 = vmatpush2.msra.mxu0 0.0
        %788 = vmatprep.subr.mxu0 0.0
        %789 = vmatpush2.msra.mxu0 0.0
        %790 = vmatprep.subr.mxu0 0.0
        %791 = vmatpush2.msra.mxu0 0.0
        %792 = vmatprep.subr.mxu0 0.0
        %793 = vmatpush2.msra.mxu0 0.0
        %794 = vmatprep.subr.mxu0 0.0
        %795 = vmatpush2.msra.mxu0 0.0
        %796 = vmatprep.subr.mxu0 0.0
        %797 = vmatpush2.msra.mxu0 0.0
        %798 = vmatprep.subr.mxu0 0.0
        %799 = vmatpush2.msra.mxu0 0.0
        %800 = vmatprep.subr.mxu0 0.0
        %801 = vmatpush2.msra.mxu0 0.0
        %802 = vmatprep.subr.mxu0 0.0
        %803 = vmatpush2.msra.mxu0 0.0
        %804 = vmatprep.subr.mxu0 0.0
        %805 = vmatpush2.msra.mxu0 0.0
        %806 = vmatprep.subr.mxu0 0.0
        %807 = vmatpush2.msra.mxu0 0.0
        %808 = vmatprep.subr.mxu0 0.0
        %809 = vmatpush2.msra.mxu0 0.0
        %810 = vmatprep.subr.mxu0 0.0
        %811 = vmatpush2.msra.mxu0 0.0
        %812 = vmatprep.subr.mxu0 0.0
        %813 = vmatpush2.msra.mxu0 0.0
        %814 = vmatprep.subr.mxu0 0.0
        %815 = vmatpush2.msra.mxu0 0.0
        %816 = vmatprep.mubr.f32.mxu0 0.0
        %817 = vmatmul.mubr.f32.gmra.mxu0 %v747
        %v818 = vpop.f32.mrf.mxu0
        %v819 = vadd.f32 0.0, %v818
        %v820 = vpop.f32.mrf.mxu0
        %821 = vmatprep.mubr.f32.mxu0 0.0
        %822 = vmatmul.mubr.f32.gmra.mxu0 %v749
        %v823 = vpop.f32.mrf.mxu0
        %v824 = vadd.f32 0.0, %v823
        %v825 = vpop.f32.mrf.mxu0
        %826 = vdwg.mxu0
        %v827 = vadd.f32 %v720, %v819
        %v828 = vadd.f32 %v725, %v824
        %v829 = vld [vmem:[%s4] sm:$0x1]
        %v831 = vlaneseq
        %v832 = vshrl.u32 %v831, 7
        %v833 = vsub.s32 0, %v832
        %v834 = vrot.slane %v829, %v833
        %v836 = vadd.f32 %v827, %v834
        %v837 = vadd.f32 %v828, %v834
        %v838 = vadd.f32 %v223, %v836
        %v839 = vadd.f32 %v224, %v837
        %v840 = vmax.f32 %v838, 0.0
        %v841 = vmax.f32 %v839, 0.0
        %842 = vst.msk [vmem:[%s217] sm:$0xff] %vm260, %v840
        %843 = vst.msk [vmem:[%s217 + $0x8] sm:$0xff] %vm260, %v841
        %s844 = sand.u32 %s137, 1
        %s845 = scalar_lea.sflag [#allocation3], %s844
        %s846 = sand.u32 %s137, 1
        %s847 = smul.addr %s846, 16
        %s848 = scalar_lea.vmem [#allocation2], %s847
        // Predicated region
        $region41: #{tpu_custom_call.1} parent=39 // pred_check
          %p849 = pneg %p147
        $region42: #{tpu_custom_call.1} parent=39 // pred_check_branch
          %851 = sbr.rel (%p849) target = $region44
        $region43: #{tpu_custom_call.1} parent=39 // pred_region
          %s853 = ssub.s32 256, 256
          %854 = vsyncadd %s845, %s853
          %s855 = smul.addr %s19, 2
          %s856 = smul.addr %s855, 128
          %s857 = scalar_lea.hbm %s5, %s856
          %s858 = sshll.u32 %s848, 4
          %s859 = int_to_ptr.vmem [resolvable:$true] %s858
          %864 = dma.vmem_to_hbm [thread:$0]  %s859, 256, %s857, %s845, 128, 128, 8
        $region44: #{tpu_custom_call.1} parent=39 // pred_fallthru
          _
      $region40: #{tpu_custom_call.1} parent=5 // pred_fallthru
        _
      %p865 = scmp.le.s32.totalorder 2, %s14
      // Predicated region
      $region45: #{tpu_custom_call.1} parent=5 // pred_check
        %p866 = pneg %p865
      $region46: #{tpu_custom_call.1} parent=5 // pred_check_branch
        %868 = sbr.rel (%p866) target = $region48
      $region47: #{tpu_custom_call.1} parent=5 // pred_region
        %s869 = ssub.s32 %s14, 2
        // Predicated region
        $region49: #{tpu_custom_call.1} parent=47 // pred_check
          %p870 = pneg %p153
        $region50: #{tpu_custom_call.1} parent=47 // pred_check_branch
          %872 = sbr.rel (%p870) target = $region52
        $region51: #{tpu_custom_call.1} parent=47 // pred_region
          %s873 = sand.u32 %s138, 1
          %s874 = scalar_lea.sflag [#allocation3], %s873
          %s875 = sand.u32 %s138, 1
          %s876 = smul.addr %s875, 16
          %s877 = scalar_lea.vmem [#allocation2], %s876
          %878 = dma.done %s874, 256
        $region52: #{tpu_custom_call.1} parent=47 // pred_fallthru
          _
      $region48: #{tpu_custom_call.1} parent=5 // pred_fallthru
        _
    $region6: #{tpu_custom_call.1} parent=1 // loop_footer
      %s18 = sadd.s32 1, %s14
    $region7: #{tpu_custom_call.1} parent=1 // loop_footer_branch
      %13 = sbr.rel target = $region3
    $region8: #{tpu_custom_call.1} parent=1 // loop_exit
      _
    %879 = vsyncpa [#allocation3], 1
    %s880 = scalar_lea.sflag [#allocation3], 1
    %881 = vsyncpa %s880, 1

</llo_original>
